<compile_context>
chip_gen: v7x
topology: tpu7x:2x2x1
jax: 0.10.0
libtpu: 0.0.40
codegen_flags: <defaults>
</compile_context>

<pallas_src>
import functools

import jax
import jax.numpy as jnp
import numpy as np
from jax import lax
from jax.experimental import pallas as pl
from jax.experimental.pallas import tpu as pltpu

EPS = 1e-5
_LANE = 128


# --------------------------------------------------------------------------
# VMEM budgeting helpers (padded tile bytes, hardware-derived cap)
# --------------------------------------------------------------------------
def _sublane(dtype) -> int:
    """Sublane padding multiple: 8 for 4-byte, 16 for bf16, 32 for 1-byte dtypes."""
    return max(8, 32 // max(jnp.dtype(dtype).itemsize, 1))


def _pad(n: int, m: int) -> int:
    return ((n + m - 1) // m) * m


def _padded_block_bytes(trailing2, dtype) -> int:
    """VMEM bytes of one (sublane, lane) tile-padded 2-D slab."""
    s, l = trailing2
    return (_pad(max(int(s), 1), _sublane(dtype))
            * _pad(max(int(l), 1), _LANE)
            * jnp.dtype(dtype).itemsize)


def _vmem_limit_and_budget():
    """(scoped-VMEM limit to request, budget for our pipelined blocks)."""
    phys = 64 << 20                       # fall back to v7x (most constrained)
    try:
        phys = int(pltpu.get_tpu_info().vmem_capacity_bytes)
    except Exception:
        pass
    limit = min(phys // 2, 64 << 20)      # 64 MiB on 128 MiB parts, 32 MiB on v7x
    budget = int(limit * 0.70)            # headroom for compiler scratch etc.
    return limit, budget


def _choose_tb(B, est_bytes, budget, *, allowed=None, prefer_multi_step=True):
    """Largest batch-tile TB (dividing B) whose estimated VMEM use fits `budget`.

    With `prefer_multi_step`, prefer the largest fitting TB < B so the single
    'parallel' grid axis has >= 2 steps (lets v7x shard across its 2 TCs).
    `allowed` restricts candidates (e.g. sublane-aligned TB for 2-D blocks).
    """
    divs = [d for d in range(1, B + 1) if B % d == 0]
    if allowed is not None:
        divs = [d for d in divs if allowed(d)] or [B]
    fitting = [d for d in divs if est_bytes(d) <= budget]
    if not fitting:
        return divs[0]
    if prefer_multi_step:
        multi = [d for d in fitting if d < B]
        if multi and B >= 2:
            return multi[-1]
    return fitting[-1]


# --------------------------------------------------------------------------
# norm kernel (shared by both layouts): one streaming pass, one-pass stats,
# affine weight folded into a single per-channel scale -> one mul + one add
# per element.  `axis` is the reduction (sequence) axis of the block.
# --------------------------------------------------------------------------
def _revin_norm_kernel(x_ref, w_ref, b_ref, y_ref, mean_ref, std_ref, *, axis):
    x = x_ref[...].astype(jnp.float32)
    inv_n = 1.0 / x.shape[axis]
    mean = jnp.sum(x, axis=axis, keepdims=True) * inv_n
    ex2 = jnp.sum(x * x, axis=axis, keepdims=True) * inv_n
    # One-pass variance; clamp >= 0 (slightly less stable than two-pass for
    # data with |mean| >> std, acceptable for RevIN inputs).
    var = jnp.maximum(ex2 - mean * mean, 0.0)
    std = jnp.sqrt(var + EPS)                 # kept statistic (matches torch)
    inv_std = lax.rsqrt(var + EPS)            # EUP path, ~free
    scale = w_ref[...] * inv_std              # fold affine weight (per channel)
    offset = b_ref[...] - mean * scale        # y = x*scale + offset
    y_ref[...] = (x * scale + offset).astype(y_ref.dtype)
    mean_ref[...] = mean.astype(mean_ref.dtype)
    std_ref[...] = std.astype(std_ref.dtype)


def revin_norm(x, weight, bias):
    """RevIN 'norm' on the module-native (B, L, C) layout (lane axis = C).

    Fully lane-dense when C >= 128.  For C << 128 prefer
    `revin_norm_channels_first` if the surrounding model can carry (B, C, L).
    Returns (y (B,L,C), mean (B,1,C), stdev (B,1,C)).
    """
    B, L, C = x.shape
    w = weight.reshape(1, 1, C).astype(jnp.float32)
    b = bias.reshape(1, 1, C).astype(jnp.float32)

    limit, budget = _vmem_limit_and_budget()
    xy_slab = _padded_block_bytes((L, C), x.dtype)        # per batch row, padded
    f32_slab = _padded_block_bytes((L, C), jnp.float32)
    stat_slab = _padded_block_bytes((1, C), jnp.float32)

    def est(tb):
        return (2 * tb * xy_slab            # x block, double buffered
                + 2 * tb * xy_slab          # y block, double buffered
                + 2 * tb * f32_slab         # in-kernel f32 upcast / temp
                + 4 * tb * stat_slab        # mean + std outputs (double buffered)
                + 4 * stat_slab)            # w, b

    TB = _choose_tb(B, est, budget)
    grid = (B // TB,)

    out_shape = (
        jax.ShapeDtypeStruct((B, L, C), x.dtype),
        jax.ShapeDtypeStruct((B, 1, C), jnp.float32),
        jax.ShapeDtypeStruct((B, 1, C), jnp.float32),
    )
    return pl.pallas_call(
        functools.partial(_revin_norm_kernel, axis=1),
        out_shape=out_shape,
        grid=grid,
        in_specs=[
            pl.BlockSpec((TB, L, C), lambda i: (i, 0, 0)),
            pl.BlockSpec((1, 1, C), lambda i: (0, 0, 0)),
            pl.BlockSpec((1, 1, C), lambda i: (0, 0, 0)),
        ],
        out_specs=(
            pl.BlockSpec((TB, L, C), lambda i: (i, 0, 0)),
            pl.BlockSpec((TB, 1, C), lambda i: (i, 0, 0)),
            pl.BlockSpec((TB, 1, C), lambda i: (i, 0, 0)),
        ),
        compiler_params=pltpu.CompilerParams(
            dimension_semantics=("parallel",),
            vmem_limit_bytes=limit,
        ),
    )(x, w, b)


def revin_norm_channels_first(x_cl, weight, bias):
    """RevIN 'norm' for channels-first (B, C, L) data (lane axis = L).

    Lane-dense variant for the common PatchTST case C << 128, L >= 128:
    full-width stores, no 128/C VMEM padding waste, contiguous HBM DMAs.
    Returns (y_cl (B,C,L), mean (B,1,C), stdev (B,1,C)).
    """
    B, C, L = x_cl.shape
    w = weight.reshape(1, C, 1).astype(jnp.float32)
    b = bias.reshape(1, C, 1).astype(jnp.float32)

    limit, budget = _vmem_limit_and_budget()
    xy_slab = _padded_block_bytes((C, L), x_cl.dtype)
    f32_slab = _padded_block_bytes((C, L), jnp.float32)
    stat_slab = _padded_block_bytes((C, 1), jnp.float32)

    def est(tb):
        return 4 * tb * xy_slab + 2 * tb * f32_slab + 4 * tb * stat_slab + 4 * stat_slab

    TB = _choose_tb(B, est, budget)
    grid = (B // TB,)

    out_shape = (
        jax.ShapeDtypeStruct((B, C, L), x_cl.dtype),
        jax.ShapeDtypeStruct((B, C, 1), jnp.float32),
        jax.ShapeDtypeStruct((B, C, 1), jnp.float32),
    )
    y_cl, mean_c, std_c = pl.pallas_call(
        functools.partial(_revin_norm_kernel, axis=2),
        out_shape=out_shape,
        grid=grid,
        in_specs=[
            pl.BlockSpec((TB, C, L), lambda i: (i, 0, 0)),
            pl.BlockSpec((1, C, 1), lambda i: (0, 0, 0)),
            pl.BlockSpec((1, C, 1), lambda i: (0, 0, 0)),
        ],
        out_specs=(
            pl.BlockSpec((TB, C, L), lambda i: (i, 0, 0)),
            pl.BlockSpec((TB, C, 1), lambda i: (i, 0, 0)),
            pl.BlockSpec((TB, C, 1), lambda i: (i, 0, 0)),
        ),
        compiler_params=pltpu.CompilerParams(
            dimension_semantics=("parallel",),
            vmem_limit_bytes=limit,
        ),
    )(x_cl, w, b)
    # (B, C, 1) -> (B, 1, C): one dim is 1, so this is a free metadata reshape.
    return y_cl, jnp.transpose(mean_c, (0, 2, 1)), jnp.transpose(std_c, (0, 2, 1))


# --------------------------------------------------------------------------
# denorm kernel: elementwise inverse transform on a tiny (B, P) tensor.
# Reciprocal of the affine weight and the target-feature stats are prepared
# in the wrapper, so the kernel is pure multiply/add.  Single grid step
# whenever the padded block fits (per-step overhead dominates here).
# --------------------------------------------------------------------------
def _revin_denorm_kernel(x_ref, b_ref, inv_w_ref, std_ref, mean_ref, y_ref):
    x = x_ref[...].astype(jnp.float32)              # (TB, P)
    x = (x - b_ref[...]) * inv_w_ref[...]           # (1, C) broadcast, no divide
    x = x * std_ref[...] + mean_ref[...]            # (TB, 1) broadcast
    y_ref[...] = x.astype(y_ref.dtype)


def revin_denorm(x, weight, bias, mean, stdev, target_idx=-1):
    B, P = x.shape
    C = weight.shape[0]
    b = bias.reshape(1, C).astype(jnp.float32)
    inv_w = (1.0 / (weight.astype(jnp.float32) + EPS * EPS)).reshape(1, C)
    std_t = stdev[:, :, target_idx].astype(jnp.float32)    # (B, 1) glue indexing
    mean_t = mean[:, :, target_idx].astype(jnp.float32)    # (B, 1)

    limit, budget = _vmem_limit_and_budget()

    def est(tb):
        blk = _padded_block_bytes((tb, P), x.dtype)
        f32 = _padded_block_bytes((tb, P), jnp.float32)
        vec = _padded_block_bytes((tb, 1), jnp.float32)
        par = _padded_block_bytes((1, C), jnp.float32)
        return 4 * blk + 2 * f32 + 4 * vec + 4 * par

    # 2-D blocks put TB on the sublane axis -> TB must be a multiple of 8 or == B.
    TB = _choose_tb(B, est, budget,
                    allowed=lambda d: d == B or d % 8 == 0,
                    prefer_multi_step=False)
    grid = (B // TB,)

    return pl.pallas_call(
        _revin_denorm_kernel,
        out_shape=jax.ShapeDtypeStruct((B, P), x.dtype),
        grid=grid,
        in_specs=[
            pl.BlockSpec((TB, P), lambda i: (i, 0)),
            pl.BlockSpec((1, C), lambda i: (0, 0)),
            pl.BlockSpec((1, C), lambda i: (0, 0)),
            pl.BlockSpec((TB, 1), lambda i: (i, 0)),
            pl.BlockSpec((TB, 1), lambda i: (i, 0)),
        ],
        out_specs=pl.BlockSpec((TB, P), lambda i: (i, 0)),
        compiler_params=pltpu.CompilerParams(
            dimension_semantics=("parallel",),
            vmem_limit_bytes=limit,
        ),
    )(x, b, inv_w, std_t, mean_t)


# --------------------------------------------------------------------------
# pure-JAX reference (mirrors the PyTorch module exactly) for verification
# --------------------------------------------------------------------------
def _ref_norm(x, weight, bias):
    mean = jnp.mean(x, axis=1, keepdims=True)
    var = jnp.var(x, axis=1, keepdims=True)   # ddof=0 == unbiased=False
    std = jnp.sqrt(var + EPS)
    y = (x - mean) / std
    y = y * weight + bias
    return y, mean, std


def _ref_denorm(x, weight, bias, mean, stdev, target_idx=-1):
    y = x - bias
    y = y / (weight + EPS * EPS)
    y = y * stdev[:, :, target_idx]
    y = y + mean[:, :, target_idx]
    return y


if __name__ == "__main__":
    B, L, C = 8, 16, 8            # batch, seq length, num_features (small demo)
    key = jax.random.PRNGKey(0)
    k1, k2 = jax.random.split(key)
    x = jax.random.normal(k1, (B, L, C), dtype=jnp.float32) * 3.0 + 1.5

    # torch init is ones/zeros; perturb slightly so the affine path is exercised.
    affine_weight = jnp.ones((C,), jnp.float32) + 0.01 * jnp.arange(C, dtype=jnp.float32)
    affine_bias = jnp.zeros((C,), jnp.float32) + 0.1

    y_ref, mean_ref, std_ref = _ref_norm(x, affine_weight, affine_bias)

    # ---- mode == 'norm' (module-native (B, L, C) layout) ----
    y_norm, mean, stdev = revin_norm(x, affine_weight, affine_bias)
    y_norm = jax.block_until_ready(y_norm)
    np.testing.assert_allclose(np.asarray(y_norm), np.asarray(y_ref), rtol=1e-5, atol=1e-5)
    np.testing.assert_allclose(np.asarray(mean), np.asarray(mean_ref), rtol=1e-5, atol=1e-5)
    np.testing.assert_allclose(np.asarray(stdev), np.asarray(std_ref), rtol=1e-5, atol=1e-5)

    # ---- lane-dense channels-first variant (for models that carry (B, C, L)) ----
    x_cl = jnp.transpose(x, (0, 2, 1))   # transpose only for the test harness
    y_cl, mean_cl, std_cl = revin_norm_channels_first(x_cl, affine_weight, affine_bias)
    y_cl = jax.block_until_ready(y_cl)
    np.testing.assert_allclose(np.asarray(jnp.transpose(y_cl, (0, 2, 1))),
                               np.asarray(y_ref), rtol=1e-5, atol=1e-5)
    np.testing.assert_allclose(np.asarray(mean_cl), np.asarray(mean_ref), rtol=1e-5, atol=1e-5)
    np.testing.assert_allclose(np.asarray(std_cl), np.asarray(std_ref), rtol=1e-5, atol=1e-5)

    # ---- mode == 'denorm' ----
    # 2-D prediction tensor (B, P) with P == num_features, per the module's broadcasting.
    x2 = jax.random.normal(k2, (B, C), dtype=jnp.float32)
    y_den = revin_denorm(x2, affine_weight, affine_bias, mean, stdev, target_idx=-1)
    y_den = jax.block_until_ready(y_den)
    y_den_ref = _ref_denorm(x2, affine_weight, affine_bias, mean_ref, std_ref, target_idx=-1)
    np.testing.assert_allclose(np.asarray(y_den), np.asarray(y_den_ref), rtol=1e-5, atol=1e-5)

    # TODO(synk): subtract_last=True branch of the module is not implemented
    # (module default is False); it would replace `mean` with x[:, -1:, :].
    print("KERNEL_OK")
</pallas_src>

<mosaic_0001>
module attributes {stable_mosaic.version = 11 : i64} {
  func.func @_revin_norm_kernel(%arg0: i32, %arg1: memref<4x16x8xf32, #tpu.memory_space<vmem>>, %arg2: memref<1x1x8xf32, #tpu.memory_space<vmem>>, %arg3: memref<1x1x8xf32, #tpu.memory_space<vmem>>, %arg4: memref<4x16x8xf32, #tpu.memory_space<vmem>>, %arg5: memref<4x1x8xf32, #tpu.memory_space<vmem>>, %arg6: memref<4x1x8xf32, #tpu.memory_space<vmem>>) attributes {dimension_semantics = [#tpu.dimension_semantics<parallel>], iteration_bounds = array<i64: 2>, scalar_prefetch = 0 : i64, scratch_operands = 0 : i64, tpu.core_type = #tpu.core_type<tc>, window_params = [{transform_indices = @transform_0, window_bounds = array<i64: 4, 16, 8>}, {pipeline_mode = #tpu.pipeline_mode<synchronous>, transform_indices = @transform_1, window_bounds = array<i64: 1, 1, 8>}, {pipeline_mode = #tpu.pipeline_mode<synchronous>, transform_indices = @transform_2, window_bounds = array<i64: 1, 1, 8>}, {transform_indices = @transform_3, window_bounds = array<i64: 4, 16, 8>}, {transform_indices = @transform_4, window_bounds = array<i64: 4, 1, 8>}, {transform_indices = @transform_5, window_bounds = array<i64: 4, 1, 8>}]} {
    %c0 = arith.constant 0 : index
    %c0_0 = arith.constant 0 : index
    %c0_1 = arith.constant 0 : index
    %0 = vector.load %arg1[%c0, %c0_0, %c0_1] : memref<4x16x8xf32, #tpu.memory_space<vmem>>, vector<4x16x8xf32>
    %cst = arith.constant dense<0.000000e+00> : vector<4x8xf32>
    %1 = vector.multi_reduction <add>, %0, %cst [1] : vector<4x16x8xf32> to vector<4x8xf32>
    %2 = vector.shape_cast %1 : vector<4x8xf32> to vector<4x1x8xf32>
    %cst_2 = arith.constant 6.250000e-02 : f32
    %3 = vector.broadcast %cst_2 : f32 to vector<4x1x8xf32>
    %4 = arith.mulf %2, %3 : vector<4x1x8xf32>
    %5 = arith.mulf %0, %0 : vector<4x16x8xf32>
    %cst_3 = arith.constant dense<0.000000e+00> : vector<4x8xf32>
    %6 = vector.multi_reduction <add>, %5, %cst_3 [1] : vector<4x16x8xf32> to vector<4x8xf32>
    %7 = vector.shape_cast %6 : vector<4x8xf32> to vector<4x1x8xf32>
    %cst_4 = arith.constant 6.250000e-02 : f32
    %8 = vector.broadcast %cst_4 : f32 to vector<4x1x8xf32>
    %9 = arith.mulf %7, %8 : vector<4x1x8xf32>
    %10 = arith.mulf %4, %4 : vector<4x1x8xf32>
    %11 = arith.subf %9, %10 : vector<4x1x8xf32>
    %cst_5 = arith.constant 0.000000e+00 : f32
    %12 = vector.broadcast %cst_5 : f32 to vector<4x1x8xf32>
    %13 = arith.maximumf %11, %12 : vector<4x1x8xf32>
    %cst_6 = arith.constant 9.99999974E-6 : f32
    %14 = vector.broadcast %cst_6 : f32 to vector<4x1x8xf32>
    %15 = arith.addf %13, %14 : vector<4x1x8xf32>
    %16 = math.sqrt %15 : vector<4x1x8xf32>
    %cst_7 = arith.constant 9.99999974E-6 : f32
    %17 = vector.broadcast %cst_7 : f32 to vector<4x1x8xf32>
    %18 = arith.addf %13, %17 : vector<4x1x8xf32>
    %19 = math.rsqrt %18 : vector<4x1x8xf32>
    %c0_8 = arith.constant 0 : index
    %c0_9 = arith.constant 0 : index
    %c0_10 = arith.constant 0 : index
    %20 = vector.load %arg2[%c0_8, %c0_9, %c0_10] : memref<1x1x8xf32, #tpu.memory_space<vmem>>, vector<1x1x8xf32>
    %21 = vector.broadcast %20 : vector<1x1x8xf32> to vector<4x1x8xf32>
    %22 = arith.mulf %21, %19 : vector<4x1x8xf32>
    %c0_11 = arith.constant 0 : index
    %c0_12 = arith.constant 0 : index
    %c0_13 = arith.constant 0 : index
    %23 = vector.load %arg3[%c0_11, %c0_12, %c0_13] : memref<1x1x8xf32, #tpu.memory_space<vmem>>, vector<1x1x8xf32>
    %24 = arith.mulf %4, %22 : vector<4x1x8xf32>
    %25 = vector.broadcast %23 : vector<1x1x8xf32> to vector<4x1x8xf32>
    %26 = arith.subf %25, %24 : vector<4x1x8xf32>
    %27 = vector.broadcast %22 : vector<4x1x8xf32> to vector<4x16x8xf32>
    %28 = arith.mulf %0, %27 : vector<4x16x8xf32>
    %29 = vector.broadcast %26 : vector<4x1x8xf32> to vector<4x16x8xf32>
    %30 = arith.addf %28, %29 : vector<4x16x8xf32>
    %c0_14 = arith.constant 0 : index
    %c0_15 = arith.constant 0 : index
    %c0_16 = arith.constant 0 : index
    %31 = vector.load %arg4[%c0_14, %c0_15, %c0_16] : memref<4x16x8xf32, #tpu.memory_space<vmem>>, vector<4x16x8xf32>
    tpu.vector_store %arg4[%c0_14, %c0_15, %c0_16], %30 {strides = array<i32>} : memref<4x16x8xf32, #tpu.memory_space<vmem>>, vector<4x16x8xf32>,
    %c0_17 = arith.constant 0 : index
    %c0_18 = arith.constant 0 : index
    %c0_19 = arith.constant 0 : index
    %32 = vector.load %arg5[%c0_17, %c0_18, %c0_19] : memref<4x1x8xf32, #tpu.memory_space<vmem>>, vector<4x1x8xf32>
    tpu.vector_store %arg5[%c0_17, %c0_18, %c0_19], %4 {strides = array<i32>} : memref<4x1x8xf32, #tpu.memory_space<vmem>>, vector<4x1x8xf32>,
    %c0_20 = arith.constant 0 : index
    %c0_21 = arith.constant 0 : index
    %c0_22 = arith.constant 0 : index
    %33 = vector.load %arg6[%c0_20, %c0_21, %c0_22] : memref<4x1x8xf32, #tpu.memory_space<vmem>>, vector<4x1x8xf32>
    tpu.vector_store %arg6[%c0_20, %c0_21, %c0_22], %16 {strides = array<i32>} : memref<4x1x8xf32, #tpu.memory_space<vmem>>, vector<4x1x8xf32>,
    return
  }
  func.func @transform_0(%arg0: i32) -> (i32, i32, i32) {
    %c0_i32 = arith.constant 0 : i32
    %c0_i32_0 = arith.constant 0 : i32
    %c0_i32_1 = arith.constant 0 : i32
    return %arg0, %c0_i32, %c0_i32_0 : i32, i32, i32
  }
  func.func @transform_1(%arg0: i32) -> (i32, i32, i32) {
    %c0_i32 = arith.constant 0 : i32
    %c0_i32_0 = arith.constant 0 : i32
    %c0_i32_1 = arith.constant 0 : i32
    %c0_i32_2 = arith.constant 0 : i32
    return %c0_i32, %c0_i32_0, %c0_i32_1 : i32, i32, i32
  }
  func.func @transform_2(%arg0: i32) -> (i32, i32, i32) {
    %c0_i32 = arith.constant 0 : i32
    %c0_i32_0 = arith.constant 0 : i32
    %c0_i32_1 = arith.constant 0 : i32
    %c0_i32_2 = arith.constant 0 : i32
    return %c0_i32, %c0_i32_0, %c0_i32_1 : i32, i32, i32
  }
  func.func @transform_3(%arg0: i32) -> (i32, i32, i32) {
    %c0_i32 = arith.constant 0 : i32
    %c0_i32_0 = arith.constant 0 : i32
    %c0_i32_1 = arith.constant 0 : i32
    return %arg0, %c0_i32, %c0_i32_0 : i32, i32, i32
  }
  func.func @transform_4(%arg0: i32) -> (i32, i32, i32) {
    %c0_i32 = arith.constant 0 : i32
    %c0_i32_0 = arith.constant 0 : i32
    %c0_i32_1 = arith.constant 0 : i32
    return %arg0, %c0_i32, %c0_i32_0 : i32, i32, i32
  }
  func.func @transform_5(%arg0: i32) -> (i32, i32, i32) {
    %c0_i32 = arith.constant 0 : i32
    %c0_i32_0 = arith.constant 0 : i32
    %c0_i32_1 = arith.constant 0 : i32
    return %arg0, %c0_i32, %c0_i32_0 : i32, i32, i32
  }
}

</mosaic_0001>

<llo_original>
// kernel: tpu_custom_call.1
$region0: #{tpu_custom_call.1}
  #allocation0 [shape = 'u32[]', space=smem, size = 0x4, offset = 0x4, fixed_abs, tag = 'smem constant byte address 0x4 - core index']
  #allocation1 [shape = 'u32[144,128]{1,0:T(1,128)}', space=vmem, size = 0x12000, scoped, tag = 'internal scratch']
  %s0 = inlined_call_operand.vmem [shape: f32[8,16,8], index: 0, kind: input, shape index: {}]
  %s1 = inlined_call_operand.vmem [shape: f32[1,1,8], index: 1, kind: input, shape index: {}]
  %s2 = inlined_call_operand.vmem [shape: f32[1,1,8], index: 2, kind: input, shape index: {}]
  %s3 = inlined_call_operand.vmem [shape: f32[8,16,8], index: 3, kind: output, shape index: {0}]
  %s4 = inlined_call_operand.hbm [shape: f32[8,1,8], index: 4, kind: output, shape index: {1}]
  %s5 = inlined_call_operand.hbm [shape: f32[8,1,8], index: 5, kind: output, shape index: {2}]
  %6 = xla_tuple %s3, %s4, %s5
  %s7 = sld [smem:[#allocation0]]
  $region61: #{tpu_custom_call.1} parent=0
    _
  %s9 = ssub.s32 1, %s7
  %s10 = scalar_select 0, %s9, %s7
  $region1: #{tpu_custom_call.1} parent=0
    #allocation2 [shape = 'u8[4096]{0}', space=vmem, size = 0x1000, scoped, tag = 'output window, operand 1']
    #allocation3 [shape = 's32[2]{0}', space=sflag, size = 0x8, scoped, tag = 'scoped memory for tpu_custom_call.1']
    #allocation4 [shape = 'u8[4096]{0}', space=vmem, size = 0x1000, scoped, tag = 'output window, operand 2']
    #allocation5 [shape = 's32[2]{0}', space=sflag, size = 0x8, scoped, tag = 'scoped memory for tpu_custom_call.1']
    %11 = vsyncpa [#allocation3], 0
    %s12 = scalar_lea.sflag [#allocation3], 1
    %13 = vsyncpa %s12, 0
    %14 = vsyncpa [#allocation5], 0
    %s15 = scalar_lea.sflag [#allocation5], 1
    %16 = vsyncpa %s15, 0
    loop: start=0, step=1, limit=4
    $region2: #{tpu_custom_call.1} parent=1 // loop_pre_header
      _
    $region3: #{tpu_custom_call.1} parent=1 // loop_header
      %s18 = sphi 0, %s22
      %p19 = scmp.ge.s32.totalorder %s18, 4
      %s28 = sphi 0, %s30
      %s31 = sphi 0, %s28
      %s32 = sphi 0, %s31
      %s48 = sphi 0, %s32
      %s52 = sphi 0, %s52
      %s54 = sphi 0, %s52
      %s55 = sphi 0, %s54
      %s69 = sphi 0, %s55
      %s73 = sphi 0, %s73
      %s75 = sphi 0, %s73
      %s76 = sphi 0, %s75
      %s90 = sphi 0, %s76
      %s96 = sphi 0, %s98
      %s99 = sphi 0, %s96
      %s100 = sphi 0, %s99
      %s116 = sphi 0, %s100
      %s122 = sphi 0, %s124
      %s125 = sphi 0, %s122
      %s126 = sphi 0, %s125
      %s142 = sphi 0, %s126
      %s148 = sphi 0, %s150
      %s151 = sphi 0, %s148
      %s152 = sphi 0, %s151
      %s168 = sphi 0, %s152
    $region4: #{tpu_custom_call.1} parent=1 // loop_header_branch
      %21 = sbr.rel (%p19) target = $region8
    $region5: #{tpu_custom_call.1} parent=1 // loop_body
      %s23 = ssub.s32 %s18, 1
      %s24 = ssub.s32 %s18, 2
      %s25 = sadd.s32 %s18, 1
      %s26 = ssub.s32 %s18, %s25
      %p27 = scmp.eq.s32.totalorder %s26, 0
      %s29 = sadd.s32 %s28, 1
      %s30 = scalar_select %p27, %s28, %s29
      %p33 = pneg %p27
      %p34 = scmp.eq.s32.totalorder %s18, 1
      %p35 = por %p33, %p34
      %p36 = scmp.ne.s32.totalorder %s28, %s31
      %p37 = scmp.eq.s32.totalorder %s18, 0
      %p38 = por %p36, %p37
      %p39 = scmp.ne.s32.totalorder %s28, %s31
      %p40 = scmp.eq.s32.totalorder %s23, 1
      %p41 = por %p39, %p40
      %p42 = scmp.ne.s32.totalorder %s31, %s32
      %p43 = scmp.eq.s32.totalorder %s23, 0
      %p44 = por %p42, %p43
      %p45 = scmp.ne.s32.totalorder %s31, %s32
      %p46 = scmp.eq.s32.totalorder %s24, 1
      %p47 = por %p45, %p46
      %p49 = scmp.ne.s32.totalorder %s32, %s48
      %p50 = scmp.eq.s32.totalorder %s24, 0
      %p51 = por %p49, %p50
      %s53 = sadd.s32 %s52, 1
      %p56 = scmp.eq.s32.totalorder %s18, 1
      %p57 = scmp.ne.s32.totalorder %s52, %s54
      %p58 = scmp.eq.s32.totalorder %s18, 0
      %p59 = por %p57, %p58
      %p60 = scmp.ne.s32.totalorder %s52, %s54
      %p61 = scmp.eq.s32.totalorder %s23, 1
      %p62 = por %p60, %p61
      %p63 = scmp.ne.s32.totalorder %s54, %s55
      %p64 = scmp.eq.s32.totalorder %s23, 0
      %p65 = por %p63, %p64
      %p66 = scmp.ne.s32.totalorder %s54, %s55
      %p67 = scmp.eq.s32.totalorder %s24, 1
      %p68 = por %p66, %p67
      %p70 = scmp.ne.s32.totalorder %s55, %s69
      %p71 = scmp.eq.s32.totalorder %s24, 0
      %p72 = por %p70, %p71
      %s74 = sadd.s32 %s73, 1
      %p77 = scmp.eq.s32.totalorder %s18, 1
      %p78 = scmp.ne.s32.totalorder %s73, %s75
      %p79 = scmp.eq.s32.totalorder %s18, 0
      %p80 = por %p78, %p79
      %p81 = scmp.ne.s32.totalorder %s73, %s75
      %p82 = scmp.eq.s32.totalorder %s23, 1
      %p83 = por %p81, %p82
      %p84 = scmp.ne.s32.totalorder %s75, %s76
      %p85 = scmp.eq.s32.totalorder %s23, 0
      %p86 = por %p84, %p85
      %p87 = scmp.ne.s32.totalorder %s75, %s76
      %p88 = scmp.eq.s32.totalorder %s24, 1
      %p89 = por %p87, %p88
      %p91 = scmp.ne.s32.totalorder %s76, %s90
      %p92 = scmp.eq.s32.totalorder %s24, 0
      %p93 = por %p91, %p92
      %s94 = ssub.s32 %s18, %s25
      %p95 = scmp.eq.s32.totalorder %s94, 0
      %s97 = sadd.s32 %s96, 1
      %s98 = scalar_select %p95, %s96, %s97
      %p101 = pneg %p95
      %p102 = scmp.eq.s32.totalorder %s18, 1
      %p103 = por %p101, %p102
      %p104 = scmp.ne.s32.totalorder %s96, %s99
      %p105 = scmp.eq.s32.totalorder %s18, 0
      %p106 = por %p104, %p105
      %p107 = scmp.ne.s32.totalorder %s96, %s99
      %p108 = scmp.eq.s32.totalorder %s23, 1
      %p109 = por %p107, %p108
      %p110 = scmp.ne.s32.totalorder %s99, %s100
      %p111 = scmp.eq.s32.totalorder %s23, 0
      %p112 = por %p110, %p111
      %p113 = scmp.ne.s32.totalorder %s99, %s100
      %p114 = scmp.eq.s32.totalorder %s24, 1
      %p115 = por %p113, %p114
      %p117 = scmp.ne.s32.totalorder %s100, %s116
      %p118 = scmp.eq.s32.totalorder %s24, 0
      %p119 = por %p117, %p118
      %s120 = ssub.s32 %s18, %s25
      %p121 = scmp.eq.s32.totalorder %s120, 0
      %s123 = sadd.s32 %s122, 1
      %s124 = scalar_select %p121, %s122, %s123
      %p127 = pneg %p121
      %p128 = scmp.eq.s32.totalorder %s18, 1
      %p129 = por %p127, %p128
      %p130 = scmp.ne.s32.totalorder %s122, %s125
      %p131 = scmp.eq.s32.totalorder %s18, 0
      %p132 = por %p130, %p131
      %p133 = scmp.ne.s32.totalorder %s122, %s125
      %p134 = scmp.eq.s32.totalorder %s23, 1
      %p135 = por %p133, %p134
      %p136 = scmp.ne.s32.totalorder %s125, %s126
      %p137 = scmp.eq.s32.totalorder %s23, 0
      %p138 = por %p136, %p137
      %p139 = scmp.ne.s32.totalorder %s125, %s126
      %p140 = scmp.eq.s32.totalorder %s24, 1
      %p141 = por %p139, %p140
      %p143 = scmp.ne.s32.totalorder %s126, %s142
      %p144 = scmp.eq.s32.totalorder %s24, 0
      %p145 = por %p143, %p144
      %s146 = ssub.s32 %s18, %s25
      %p147 = scmp.eq.s32.totalorder %s146, 0
      %s149 = sadd.s32 %s148, 1
      %s150 = scalar_select %p147, %s148, %s149
      %p153 = pneg %p147
      %p154 = scmp.eq.s32.totalorder %s18, 1
      %p155 = por %p153, %p154
      %p156 = scmp.ne.s32.totalorder %s148, %s151
      %p157 = scmp.eq.s32.totalorder %s18, 0
      %p158 = por %p156, %p157
      %p159 = scmp.ne.s32.totalorder %s148, %s151
      %p160 = scmp.eq.s32.totalorder %s23, 1
      %p161 = por %p159, %p160
      %p162 = scmp.ne.s32.totalorder %s151, %s152
      %p163 = scmp.eq.s32.totalorder %s23, 0
      %p164 = por %p162, %p163
      %p165 = scmp.ne.s32.totalorder %s151, %s152
      %p166 = scmp.eq.s32.totalorder %s24, 1
      %p167 = por %p165, %p166
      %p169 = scmp.ne.s32.totalorder %s152, %s168
      %p170 = scmp.eq.s32.totalorder %s24, 0
      %p171 = por %p169, %p170
      %p172 = scmp.le.s32.totalorder 1, %s18
      %p173 = scmp.lt.s32.totalorder %s18, 3
      %p174 = pnand %p172, %p173
      %p175 = pneg %p174
      // Predicated region
      $region9: #{tpu_custom_call.1} parent=5 // pred_check
        _
      $region10: #{tpu_custom_call.1} parent=5 // pred_check_branch
        %177 = sbr.rel (%p174) target = $region12
      $region11: #{tpu_custom_call.1} parent=5 // pred_region
        %s178 = ssub.s32 %s18, 1
        // Predicated region
        $region13: #{tpu_custom_call.1} parent=11 // pred_check
          %p179 = pneg %p65
        $region14: #{tpu_custom_call.1} parent=11 // pred_check_branch
          %181 = sbr.rel (%p179) target = $region16
        $region15: #{tpu_custom_call.1} parent=11 // pred_region
          _
        $region16: #{tpu_custom_call.1} parent=11 // pred_fallthru
          _
        // Predicated region
        $region17: #{tpu_custom_call.1} parent=11 // pred_check
          %p182 = pneg %p86
        $region18: #{tpu_custom_call.1} parent=11 // pred_check_branch
          %184 = sbr.rel (%p182) target = $region20
        $region19: #{tpu_custom_call.1} parent=11 // pred_region
          _
        $region20: #{tpu_custom_call.1} parent=11 // pred_fallthru
          _
      $region12: #{tpu_custom_call.1} parent=5 // pred_fallthru
        _
      %p185 = scmp.lt.s32.totalorder %s18, 2
      // Predicated region
      $region21: #{tpu_custom_call.1} parent=5 // pred_check
        %p186 = pneg %p185
      $region22: #{tpu_custom_call.1} parent=5 // pred_check_branch
        %188 = sbr.rel (%p186) target = $region24
      $region23: #{tpu_custom_call.1} parent=5 // pred_region
        // Predicated region
        $region25: #{tpu_custom_call.1} parent=23 // pred_check
          %p189 = pneg %p38
        $region26: #{tpu_custom_call.1} parent=23 // pred_check_branch
          %191 = sbr.rel (%p189) target = $region28
        $region27: #{tpu_custom_call.1} parent=23 // pred_region
          %s192 = smul.u32 4, %s18
          %p193 = scmp.lt.s32.totalorder %s192, 7
          %s194 = scalar_select %p193, %s192, 7
          %s195 = smul.addr %s194, 2
          %s196 = smul.addr %s195, 8
          %s197 = scalar_lea.vmem %s0, %s196
          %s198 = smul.u32 4, %s18
        $region28: #{tpu_custom_call.1} parent=23 // pred_fallthru
          _
      $region24: #{tpu_custom_call.1} parent=5 // pred_fallthru
        _
      %p199 = scmp.le.s32.totalorder 1, %s18
      %p200 = scmp.lt.s32.totalorder %s18, 3
      %p201 = pnand %p199, %p200
      %p202 = pneg %p201
      // Predicated region
      $region29: #{tpu_custom_call.1} parent=5 // pred_check
        _
      $region30: #{tpu_custom_call.1} parent=5 // pred_check_branch
        %204 = sbr.rel (%p201) target = $region32
      $region31: #{tpu_custom_call.1} parent=5 // pred_region
        %s205 = ssub.s32 %s18, 1
        %s206 = smul.u32 4, %s23
        %p207 = scmp.lt.s32.totalorder %s206, 7
        %s208 = scalar_select %p207, %s206, 7
        %s209 = smul.addr %s208, 2
        %s210 = smul.addr %s209, 8
        %s211 = scalar_lea.vmem %s0, %s210
        %p212 = pneg %p44
        %p213 = pneg %p41
        %p214 = pneg %p65
        %p215 = pneg %p62
        %p216 = pneg %p86
        %p217 = pneg %p83
        %p218 = pneg %p112
        %p219 = pneg %p109
        %s220 = smul.u32 4, %s23
        %p221 = scmp.lt.s32.totalorder %s220, 7
        %s222 = scalar_select %p221, %s220, 7
        %s223 = smul.addr %s222, 2
        %s224 = smul.addr %s223, 8
        %s225 = scalar_lea.vmem %s3, %s224
        %p226 = pneg %p138
        %p227 = pneg %p135
        %s228 = sand.u32 %s125, 1
        %s229 = scalar_lea.sflag [#allocation3], %s228
        %s230 = sand.u32 %s125, 1
        %s231 = smul.addr %s230, 4
        %s232 = scalar_lea.vmem [#allocation2], %s231
        %p233 = pneg %p164
        %p234 = pneg %p161
        %s235 = sand.u32 %s151, 1
        %s236 = scalar_lea.sflag [#allocation5], %s235
        %s237 = sand.u32 %s151, 1
        %s238 = smul.addr %s237, 4
        %s239 = scalar_lea.vmem [#allocation4], %s238
        %s240 = smul.u32 4, %s23
        %p241 = scmp.lt.s32.totalorder %s240, 7
        %s242 = scalar_select %p241, %s240, 7
        %s243 = smul.addr %s242, 2
        %s244 = smul.addr %s243, 8
        %s245 = scalar_lea.vmem %s0, %s244
        %s246 = smul.u32 4, %s23
        %s247 = smul.u32 4, %s23
        %p248 = scmp.lt.s32.totalorder %s247, 7
        %s249 = scalar_select %p248, %s247, 7
        %s250 = smul.addr %s249, 2
        %s251 = smul.addr %s250, 8
        %s252 = scalar_lea.vmem %s3, %s251
        %s253 = smul.u32 4, %s23
        %s254 = smul.u32 4, %s23
        %s255 = smul.u32 4, %s23
        %v256 = vld [vmem:[%s245] sm:$0xff]
        %v257 = vld [vmem:[%s245 + $0x8] sm:$0xff]
        %v258 = vld [vmem:[%s245 + $0x10] sm:$0xff]
        %v259 = vld [vmem:[%s245 + $0x18] sm:$0xff]
        %v260 = vld [vmem:[%s245 + $0x20] sm:$0xff]
        %v261 = vld [vmem:[%s245 + $0x28] sm:$0xff]
        %v262 = vld [vmem:[%s245 + $0x30] sm:$0xff]
        %v263 = vld [vmem:[%s245 + $0x38] sm:$0xff]
        %vm264 = vcmask 64512
        %v265 = vsel %vm264, %v256, 0.0
        %v266 = vsel %vm264, %v257, 0.0
        %v267 = vadd.f32 %v265, %v266
        %v268 = vrot.slane %v267, 4
        %v269 = vadd.f32 %v267, %v268
        %v270 = vrot.slane %v269, 2
        %v271 = vadd.f32 %v269, %v270
        %v272 = vrot.slane %v271, 1
        %v273 = vadd.f32 %v271, %v272
        %v274 = vsel %vm264, %v258, 0.0
        %v275 = vsel %vm264, %v259, 0.0
        %v276 = vadd.f32 %v274, %v275
        %v277 = vrot.slane %v276, 4
        %v278 = vadd.f32 %v276, %v277
        %v279 = vrot.slane %v278, 2
        %v280 = vadd.f32 %v278, %v279
        %v281 = vrot.slane %v280, 1
        %v282 = vadd.f32 %v280, %v281
        %v283 = vsel %vm264, %v260, 0.0
        %v284 = vsel %vm264, %v261, 0.0
        %v285 = vadd.f32 %v283, %v284
        %v286 = vrot.slane %v285, 4
        %v287 = vadd.f32 %v285, %v286
        %v288 = vrot.slane %v287, 2
        %v289 = vadd.f32 %v287, %v288
        %v290 = vrot.slane %v289, 1
        %v291 = vadd.f32 %v289, %v290
        %v292 = vsel %vm264, %v262, 0.0
        %v293 = vsel %vm264, %v263, 0.0
        %v294 = vadd.f32 %v292, %v293
        %v295 = vrot.slane %v294, 4
        %v296 = vadd.f32 %v294, %v295
        %v297 = vrot.slane %v296, 2
        %v298 = vadd.f32 %v296, %v297
        %v299 = vrot.slane %v298, 1
        %v300 = vadd.f32 %v298, %v299
        %v301 = vmul.f32 %v273, 0.0625
        %v302 = vmul.f32 %v282, 0.0625
        %v303 = vmul.f32 %v291, 0.0625
        %v304 = vmul.f32 %v300, 0.0625
        %v305 = vmul.f32 %v256, %v256
        %v306 = vmul.f32 %v257, %v257
        %v307 = vmul.f32 %v258, %v258
        %v308 = vmul.f32 %v259, %v259
        %v309 = vmul.f32 %v260, %v260
        %v310 = vmul.f32 %v261, %v261
        %v311 = vmul.f32 %v262, %v262
        %v312 = vmul.f32 %v263, %v263
        %v313 = vsel %vm264, %v305, 0.0
        %v314 = vsel %vm264, %v306, 0.0
        %v315 = vadd.f32 %v313, %v314
        %v316 = vrot.slane %v315, 4
        %v317 = vadd.f32 %v315, %v316
        %v318 = vrot.slane %v317, 2
        %v319 = vadd.f32 %v317, %v318
        %v320 = vrot.slane %v319, 1
        %v321 = vadd.f32 %v319, %v320
        %v322 = vsel %vm264, %v307, 0.0
        %v323 = vsel %vm264, %v308, 0.0
        %v324 = vadd.f32 %v322, %v323
        %v325 = vrot.slane %v324, 4
        %v326 = vadd.f32 %v324, %v325
        %v327 = vrot.slane %v326, 2
        %v328 = vadd.f32 %v326, %v327
        %v329 = vrot.slane %v328, 1
        %v330 = vadd.f32 %v328, %v329
        %v331 = vsel %vm264, %v309, 0.0
        %v332 = vsel %vm264, %v310, 0.0
        %v333 = vadd.f32 %v331, %v332
        %v334 = vrot.slane %v333, 4
        %v335 = vadd.f32 %v333, %v334
        %v336 = vrot.slane %v335, 2
        %v337 = vadd.f32 %v335, %v336
        %v338 = vrot.slane %v337, 1
        %v339 = vadd.f32 %v337, %v338
        %v340 = vsel %vm264, %v311, 0.0
        %v341 = vsel %vm264, %v312, 0.0
        %v342 = vadd.f32 %v340, %v341
        %v343 = vrot.slane %v342, 4
        %v344 = vadd.f32 %v342, %v343
        %v345 = vrot.slane %v344, 2
        %v346 = vadd.f32 %v344, %v345
        %v347 = vrot.slane %v346, 1
        %v348 = vadd.f32 %v346, %v347
        %v349 = vmul.f32 %v321, 0.0625
        %v350 = vmul.f32 %v330, 0.0625
        %v351 = vmul.f32 %v339, 0.0625
        %v352 = vmul.f32 %v348, 0.0625
        %v353 = vmul.f32 %v301, %v301
        %v354 = vmul.f32 %v302, %v302
        %v355 = vmul.f32 %v303, %v303
        %v356 = vmul.f32 %v304, %v304
        %v357 = vsub.f32 %v349, %v353
        %v358 = vsub.f32 %v350, %v354
        %v359 = vsub.f32 %v351, %v355
        %v360 = vsub.f32 %v352, %v356
        %v361 = vmax.f32 %v357, 0.0
        %v362 = vmax.f32 %v358, 0.0
        %v363 = vmax.f32 %v359, 0.0
        %v364 = vmax.f32 %v360, 0.0
        %v365 = vadd.f32 %v361, 1e-05
        %v366 = vadd.f32 %v362, 1e-05
        %v367 = vadd.f32 %v363, 1e-05
        %v368 = vadd.f32 %v364, 1e-05
        %v369 = vrsqrt.pop %v365
        %v370 = vmul.f32 %v365, %v369
        %vm371 = vcmp.eq.f32.partialorder %v365, inf
        %v372 = vsel %vm371, %v365, %v370
        %vm373 = vcmp.eq.f32.partialorder %v365, 0.0
        %v374 = vand.u32 %v365, 2147483648
        %v375 = vsel %vm373, %v374, %v372
        %v376 = vrsqrt.pop %v366
        %v377 = vmul.f32 %v366, %v376
        %vm378 = vcmp.eq.f32.partialorder %v366, inf
        %v379 = vsel %vm378, %v366, %v377
        %vm380 = vcmp.eq.f32.partialorder %v366, 0.0
        %v381 = vand.u32 %v366, 2147483648
        %v382 = vsel %vm380, %v381, %v379
        %v383 = vrsqrt.pop %v367
        %v384 = vmul.f32 %v367, %v383
        %vm385 = vcmp.eq.f32.partialorder %v367, inf
        %v386 = vsel %vm385, %v367, %v384
        %vm387 = vcmp.eq.f32.partialorder %v367, 0.0
        %v388 = vand.u32 %v367, 2147483648
        %v389 = vsel %vm387, %v388, %v386
        %v390 = vrsqrt.pop %v368
        %v391 = vmul.f32 %v368, %v390
        %vm392 = vcmp.eq.f32.partialorder %v368, inf
        %v393 = vsel %vm392, %v368, %v391
        %vm394 = vcmp.eq.f32.partialorder %v368, 0.0
        %v395 = vand.u32 %v368, 2147483648
        %v396 = vsel %vm394, %v395, %v393
        %v397 = vrsqrt.pop %v365
        %v398 = vrsqrt.pop %v366
        %v399 = vrsqrt.pop %v367
        %v400 = vrsqrt.pop %v368
        %v401 = vld [vmem:[%s1] sm:$0x1]
        %v402 = vmul.f32 %v401, %v397
        %v403 = vmul.f32 %v401, %v398
        %v404 = vmul.f32 %v401, %v399
        %v405 = vmul.f32 %v401, %v400
        %v406 = vld [vmem:[%s2] sm:$0x1]
        %v407 = vmul.f32 %v301, %v402
        %v408 = vmul.f32 %v302, %v403
        %v409 = vmul.f32 %v303, %v404
        %v410 = vmul.f32 %v304, %v405
        %v411 = vsub.f32 %v406, %v407
        %v412 = vsub.f32 %v406, %v408
        %v413 = vsub.f32 %v406, %v409
        %v414 = vsub.f32 %v406, %v410
        %v419 = vlaneseq
        %v420 = vshrl.u32 %v419, 7
        %v421 = vsub.s32 0, %v420
        %v422 = vrot.slane %v402, %v421
        %v423 = vlaneseq
        %v424 = vshrl.u32 %v423, 7
        %v425 = vsub.s32 0, %v424
        %v426 = vrot.slane %v403, %v425
        %v427 = vlaneseq
        %v428 = vshrl.u32 %v427, 7
        %v429 = vsub.s32 0, %v428
        %v430 = vrot.slane %v404, %v429
        %v431 = vlaneseq
        %v432 = vshrl.u32 %v431, 7
        %v433 = vsub.s32 0, %v432
        %v434 = vrot.slane %v405, %v433
        %v439 = vmul.f32 %v256, %v422
        %v440 = vmul.f32 %v257, %v422
        %v441 = vmul.f32 %v258, %v426
        %v442 = vmul.f32 %v259, %v426
        %v443 = vmul.f32 %v260, %v430
        %v444 = vmul.f32 %v261, %v430
        %v445 = vmul.f32 %v262, %v434
        %v446 = vmul.f32 %v263, %v434
        %v451 = vlaneseq
        %v452 = vshrl.u32 %v451, 7
        %v453 = vsub.s32 0, %v452
        %v454 = vrot.slane %v411, %v453
        %v455 = vlaneseq
        %v456 = vshrl.u32 %v455, 7
        %v457 = vsub.s32 0, %v456
        %v458 = vrot.slane %v412, %v457
        %v459 = vlaneseq
        %v460 = vshrl.u32 %v459, 7
        %v461 = vsub.s32 0, %v460
        %v462 = vrot.slane %v413, %v461
        %v463 = vlaneseq
        %v464 = vshrl.u32 %v463, 7
        %v465 = vsub.s32 0, %v464
        %v466 = vrot.slane %v414, %v465
        %v471 = vadd.f32 %v439, %v454
        %v472 = vadd.f32 %v440, %v454
        %v473 = vadd.f32 %v441, %v458
        %v474 = vadd.f32 %v442, %v458
        %v475 = vadd.f32 %v443, %v462
        %v476 = vadd.f32 %v444, %v462
        %v477 = vadd.f32 %v445, %v466
        %v478 = vadd.f32 %v446, %v466
        %479 = vst.msk [vmem:[%s252] sm:$0xff] %vm264, %v471
        %480 = vst.msk [vmem:[%s252 + $0x8] sm:$0xff] %vm264, %v472
        %481 = vst.msk [vmem:[%s252 + $0x10] sm:$0xff] %vm264, %v473
        %482 = vst.msk [vmem:[%s252 + $0x18] sm:$0xff] %vm264, %v474
        %483 = vst.msk [vmem:[%s252 + $0x20] sm:$0xff] %vm264, %v475
        %484 = vst.msk [vmem:[%s252 + $0x28] sm:$0xff] %vm264, %v476
        %485 = vst.msk [vmem:[%s252 + $0x30] sm:$0xff] %vm264, %v477
        %486 = vst.msk [vmem:[%s252 + $0x38] sm:$0xff] %vm264, %v478
        %vm487 = vcmask 57344
        %488 = vst.msk [vmem:[%s232] sm:$0x1] %vm487, %v301
        %489 = vst.msk [vmem:[%s232 + $0x1] sm:$0x1] %vm487, %v302
        %490 = vst.msk [vmem:[%s232 + $0x2] sm:$0x1] %vm487, %v303
        %491 = vst.msk [vmem:[%s232 + $0x3] sm:$0x1] %vm487, %v304
        %492 = vst.msk [vmem:[%s239] sm:$0x1] %vm487, %v375
        %493 = vst.msk [vmem:[%s239 + $0x1] sm:$0x1] %vm487, %v382
        %494 = vst.msk [vmem:[%s239 + $0x2] sm:$0x1] %vm487, %v389
        %495 = vst.msk [vmem:[%s239 + $0x3] sm:$0x1] %vm487, %v396
        %s496 = smul.u32 4, %s23
        %p497 = scmp.lt.s32.totalorder %s496, 7
        %s498 = scalar_select %p497, %s496, 7
        %s499 = smul.addr %s498, 2
        %s500 = smul.addr %s499, 8
        %s501 = scalar_lea.vmem %s3, %s500
        %s502 = sand.u32 %s125, 1
        %s503 = scalar_lea.sflag [#allocation3], %s502
        %s504 = sand.u32 %s125, 1
        %s505 = smul.addr %s504, 4
        %s506 = scalar_lea.vmem [#allocation2], %s505
        %s507 = sand.u32 %s151, 1
        %s508 = scalar_lea.sflag [#allocation5], %s507
        %s509 = sand.u32 %s151, 1
        %s510 = smul.addr %s509, 4
        %s511 = scalar_lea.vmem [#allocation4], %s510
        // Predicated region
        $region33: #{tpu_custom_call.1} parent=31 // pred_check
          %p512 = pneg %p109
        $region34: #{tpu_custom_call.1} parent=31 // pred_check_branch
          %514 = sbr.rel (%p512) target = $region36
        $region35: #{tpu_custom_call.1} parent=31 // pred_region
          %s515 = smul.u32 4, %s23
        $region36: #{tpu_custom_call.1} parent=31 // pred_fallthru
          _
        // Predicated region
        $region37: #{tpu_custom_call.1} parent=31 // pred_check
          %p516 = pneg %p135
        $region38: #{tpu_custom_call.1} parent=31 // pred_check_branch
          %518 = sbr.rel (%p516) target = $region40
        $region39: #{tpu_custom_call.1} parent=31 // pred_region
          %s519 = smul.u32 4, %s23
          %s521 = ssub.s32 64, 64
          %522 = vsyncadd %s503, %s521
          %s523 = smul.addr %s519, 16
          %s524 = scalar_lea.hbm %s4, %s523
          %s525 = sshll.u32 %s506, 4
          %s526 = int_to_ptr.vmem [resolvable:$true] %s525
          %531 = dma.vmem_to_hbm [thread:$0]  %s526, 64, %s524, %s503, 16, 16, 1
        $region40: #{tpu_custom_call.1} parent=31 // pred_fallthru
          _
        // Predicated region
        $region41: #{tpu_custom_call.1} parent=31 // pred_check
          %p532 = pneg %p161
        $region42: #{tpu_custom_call.1} parent=31 // pred_check_branch
          %534 = sbr.rel (%p532) target = $region44
        $region43: #{tpu_custom_call.1} parent=31 // pred_region
          %s535 = smul.u32 4, %s23
          %s537 = ssub.s32 64, 64
          %538 = vsyncadd %s508, %s537
          %s539 = smul.addr %s535, 16
          %s540 = scalar_lea.hbm %s5, %s539
          %s541 = sshll.u32 %s511, 4
          %s542 = int_to_ptr.vmem [resolvable:$true] %s541
          %547 = dma.vmem_to_hbm [thread:$0]  %s542, 64, %s540, %s508, 16, 16, 1
        $region44: #{tpu_custom_call.1} parent=31 // pred_fallthru
          _
      $region32: #{tpu_custom_call.1} parent=5 // pred_fallthru
        _
      %p548 = scmp.le.s32.totalorder 2, %s18
      // Predicated region
      $region45: #{tpu_custom_call.1} parent=5 // pred_check
        %p549 = pneg %p548
      $region46: #{tpu_custom_call.1} parent=5 // pred_check_branch
        %551 = sbr.rel (%p549) target = $region48
      $region47: #{tpu_custom_call.1} parent=5 // pred_region
        %s552 = ssub.s32 %s18, 2
        // Predicated region
        $region49: #{tpu_custom_call.1} parent=47 // pred_check
          %p553 = pneg %p115
        $region50: #{tpu_custom_call.1} parent=47 // pred_check_branch
          %555 = sbr.rel (%p553) target = $region52
        $region51: #{tpu_custom_call.1} parent=47 // pred_region
          %s556 = smul.u32 4, %s24
          %p557 = scmp.lt.s32.totalorder %s556, 7
          %s558 = scalar_select %p557, %s556, 7
          %s559 = smul.addr %s558, 2
          %s560 = smul.addr %s559, 8
          %s561 = scalar_lea.vmem %s3, %s560
        $region52: #{tpu_custom_call.1} parent=47 // pred_fallthru
          _
        // Predicated region
        $region53: #{tpu_custom_call.1} parent=47 // pred_check
          %p562 = pneg %p141
        $region54: #{tpu_custom_call.1} parent=47 // pred_check_branch
          %564 = sbr.rel (%p562) target = $region56
        $region55: #{tpu_custom_call.1} parent=47 // pred_region
          %s565 = sand.u32 %s126, 1
          %s566 = scalar_lea.sflag [#allocation3], %s565
          %s567 = sand.u32 %s126, 1
          %s568 = smul.addr %s567, 4
          %s569 = scalar_lea.vmem [#allocation2], %s568
          %570 = dma.done %s566, 64
        $region56: #{tpu_custom_call.1} parent=47 // pred_fallthru
          _
        // Predicated region
        $region57: #{tpu_custom_call.1} parent=47 // pred_check
          %p571 = pneg %p167
        $region58: #{tpu_custom_call.1} parent=47 // pred_check_branch
          %573 = sbr.rel (%p571) target = $region60
        $region59: #{tpu_custom_call.1} parent=47 // pred_region
          %s574 = sand.u32 %s152, 1
          %s575 = scalar_lea.sflag [#allocation5], %s574
          %s576 = sand.u32 %s152, 1
          %s577 = smul.addr %s576, 4
          %s578 = scalar_lea.vmem [#allocation4], %s577
          %579 = dma.done %s575, 64
        $region60: #{tpu_custom_call.1} parent=47 // pred_fallthru
          _
      $region48: #{tpu_custom_call.1} parent=5 // pred_fallthru
        _
    $region6: #{tpu_custom_call.1} parent=1 // loop_footer
      %s22 = sadd.s32 1, %s18
    $region7: #{tpu_custom_call.1} parent=1 // loop_footer_branch
      %17 = sbr.rel target = $region3
    $region8: #{tpu_custom_call.1} parent=1 // loop_exit
      _
    %580 = vsyncpa [#allocation3], 1
    %s581 = scalar_lea.sflag [#allocation3], 1
    %582 = vsyncpa %s581, 1
    %583 = vsyncpa [#allocation5], 1
    %s584 = scalar_lea.sflag [#allocation5], 1
    %585 = vsyncpa %s584, 1

</llo_original>
